<compile_context>
chip_gen: v7x
topology: tpu7x:2x2x1
jax: 0.10.0
libtpu: 0.0.40
codegen_flags: <defaults>
</compile_context>

<pallas_src>
import functools
import math

import jax
import jax.numpy as jnp
from jax.experimental import pallas as pl
from jax.experimental.pallas import tpu as pltpu


# --------------------------------------------------------------------------- kernel
def _sdpa_kernel(*refs, scale, e, has_mask, transpose_k, matmul_dtype, approx_recip):
    if has_mask:
        q_ref, k_ref, v_ref, m_ref, out_ref, score_ref = refs
    else:
        q_ref, k_ref, v_ref, out_ref, score_ref = refs
        m_ref = None

    # q block: (G, TQ, D); k block: (G, D, L) if transposed else (G, L, D); v: (G, L, D)
    q = (q_ref[0].astype(jnp.float32) * scale).astype(matmul_dtype)  # scale on (TQ,D)
    k = k_ref[0].astype(matmul_dtype)
    v = v_ref[0].astype(matmul_dtype)

    # score = (q * scale) @ k^T, f32 accumulation on the MXU
    if transpose_k:
        s = jnp.einsum("gqd,gdk->gqk", q, k, preferred_element_type=jnp.float32)
    else:
        s = jnp.einsum("gqd,gkd->gqk", q, k, preferred_element_type=jnp.float32)

    if m_ref is not None:
        m = m_ref[0]                                   # int8, broadcastable vs (G,TQ,L)
        s = jnp.where(m == 0, jnp.float32(e), s)       # exact masked_fill semantics

    # numerically-stable softmax along the key axis (matches nn.Softmax(dim=-1))
    mx = jnp.max(s, axis=-1, keepdims=True)
    p = jnp.exp(s - mx)
    denom = jnp.sum(p, axis=-1, keepdims=True)
    probs = p * pl.reciprocal(denom, approx=approx_recip)

    out = jnp.einsum("gqk,gkd->gqd", probs.astype(matmul_dtype), v,
                     preferred_element_type=jnp.float32)

    out_ref[0] = out.astype(out_ref.dtype)
    score_ref[0] = probs.astype(score_ref.dtype)


# --------------------------------------------------------------------------- tiling
def _round_up(x, m):
    return ((x + m - 1) // m) * m


def _block_bytes(shape, dtype):
    """Real VMEM footprint of a block: last two dims padded to the (8*pack, 128) tile."""
    dt = jnp.dtype(dtype)
    pack = max(1, 4 // dt.itemsize)            # bf16 packs 2 / int8 packs 4 per sublane
    lead = 1
    for d in shape[:-2]:
        lead *= d
    s = _round_up(shape[-2], 8 * pack)
    l = _round_up(shape[-1], 128)
    return lead * s * l * dt.itemsize


def _vmem_capacity_bytes():
    try:
        info = pltpu.get_tpu_info()
        cap = int(getattr(info, "vmem_capacity_bytes", 0) or 0)
        if cap > 0:
            return cap
    except Exception:
        pass
    return 64 * 2**20                          # conservative fallback (v7x per-core)


def _choose_tiles(H, L, D, q_dtype, out_dtype, score_dtype, mask_info, transpose_k,
                  budget):
    """Pick (G heads / step, TQ query rows / step) under a layout-aware VMEM budget."""

    def est(g, tq):
        qb = _block_bytes((g, tq, D), q_dtype)
        kb = _block_bytes((g, D, L) if transpose_k else (g, L, D), q_dtype)
        vb = _block_bytes((g, L, D), q_dtype)
        ob = _block_bytes((g, tq, D), out_dtype)
        sb = _block_bytes((g, tq, L), score_dtype)
        mb = 0
        if mask_info is not None:
            h_full, q_full, km = mask_info
            mb = _block_bytes((g if h_full else 1, tq if q_full else 1, km), jnp.int8)
        return 2 * (qb + kb + vb + ob + sb + mb)       # double-buffered pipeline

    l8 = _round_up(L, 8)
    cands = [c for c in (1024, 512, 256, 128, 64, 32, 16, 8) if c <= l8] or [l8]

    def pick_tq(g):
        for cand in cands:
            if est(g, cand) <= budget:
                return cand
        return cands[-1]

    g0 = math.gcd(H, max(1, 128 // D)) if D < 128 else 1
    best = None
    for g in sorted((d for d in range(1, g0 + 1) if g0 % d == 0), reverse=True):
        tq = pick_tq(g)
        key = (est(g, tq) <= budget,           # fits the budget
               tq >= min(256, l8),             # fills the 256-wide MXU M dim (v6e/v7x)
               g * tq,                         # block area (fewer grid steps)
               tq)
        if best is None or key > best[0]:
            best = (key, g, tq)
    _, G, TQ = best
    return G, TQ, est(G, TQ)


# --------------------------------------------------------------------------- wrapper
def scale_dot_product_attention(q, k, v, mask=None, e=-1000000000.0, *,
                                matmul_dtype=None, score_dtype=None, approx_recip=None):
    """Pallas TPU implementation of ScaleDotProductAttention.forward.

    q, k, v: (B, H, L, D). mask (optional): broadcastable to (B, H, L, L).
    matmul_dtype: MXU input dtype. Defaults to bfloat16 for float32 inputs (f32
        accumulation and f32 softmax are kept); pass jnp.float32 for a bit-tight path.
    score_dtype: dtype of the returned (B, H, L, L) score. Defaults to the input dtype
        (module semantics); jnp.bfloat16 is recommended on v5e/v6e (halves the dominant
        HBM score writeback and the score VMEM tile).
    approx_recip: EUP approximate reciprocal for the softmax denominator; defaults to
        True on the bf16 matmul path.
    Returns (attended_v, score).
    """
    q = jnp.asarray(q)
    k = jnp.asarray(k)
    v = jnp.asarray(v)
    B, H, L, D = k.shape
    out_dtype = q.dtype
    score_dt = jnp.dtype(score_dtype) if score_dtype is not None else jnp.dtype(q.dtype)
    if matmul_dtype is not None:
        mm_dtype = jnp.dtype(matmul_dtype)
    elif jnp.dtype(q.dtype) == jnp.dtype(jnp.float32):
        mm_dtype = jnp.dtype(jnp.bfloat16)     # fast default (critical on v5e MXU)
    else:
        mm_dtype = jnp.dtype(q.dtype)
    if approx_recip is None:
        approx_recip = mm_dtype == jnp.dtype(jnp.bfloat16)
    scale = 1.0 / math.sqrt(D)
    has_mask = mask is not None

    # --- mask: keep broadcastable shape (no (B,H,L,L) HBM materialisation), int8 ---
    mask_info = None
    m = None
    if has_mask:
        m = jnp.asarray(mask)
        if m.ndim < 4:
            m = m.reshape((1,) * (4 - m.ndim) + m.shape)
        tgt = (B, H, L, L)
        if any(d not in (1, t) for d, t in zip(m.shape, tgt)):
            m = jnp.broadcast_to(m, tgt)       # rare non-trivial extents: materialise
        m = (m != 0).astype(jnp.int8)
        Bm, Hm, Qm, Km = m.shape
        mask_b_full, mask_h_full, mask_q_full = (Bm == B), (Hm == H), (Qm == L)
        mask_info = (mask_h_full, mask_q_full, Km)

    # --- k layout: lane-dense in L when D < 128 (no 128/D VMEM padding, long DMAs) ---
    transpose_k = D < 128
    k_in = jnp.swapaxes(k, 2, 3) if transpose_k else k   # (B,H,D,L) or (B,H,L,D)

    # --- tiling under a per-generation, layout-aware VMEM budget ---
    capacity = _vmem_capacity_bytes()
    budget = max(8 * 2**20, int(0.45 * capacity))
    G, TQ, vmem_est = _choose_tiles(H, L, D, q.dtype, out_dtype, score_dt, mask_info,
                                    transpose_k, budget)
    HG = H // G

    # --- query-axis padding so L need not divide TQ (keys stay whole -> no key mask) ---
    NQ = -(-L // TQ)
    TQ = _round_up(-(-L // NQ), 8)             # shrink TQ to minimise pad waste
    Lq = NQ * TQ
    if Lq != L:
        q = jnp.pad(q, ((0, 0), (0, 0), (0, Lq - L), (0, 0)))
        if has_mask and mask_q_full:
            m = jnp.pad(m, ((0, 0), (0, 0), (0, Lq - L), (0, 0)), constant_values=1)

    # vmem_est already includes the 2x pipeline buffering; just add headroom and clamp.
    vmem_floor = min(32 * 2**20, capacity // 2)
    vmem_limit = int(min(max(vmem_est + 8 * 2**20, vmem_floor), int(0.75 * capacity)))

    # --- grid & specs: (batch, head-group, q-tile); k/v revisited across inner axis ---
    def qmap(b, hg, qi):
        return (b, hg, qi, 0)

    def kvmap(b, hg, qi):
        return (b, hg, 0, 0)

    in_specs = [
        pl.BlockSpec((1, G, TQ, D), qmap),
        pl.BlockSpec((1, G, D, L) if transpose_k else (1, G, L, D), kvmap),
        pl.BlockSpec((1, G, L, D), kvmap),
    ]
    args = [q, k_in, v]

    if has_mask:
        m_blk = (1, G if mask_h_full else 1, TQ if mask_q_full else 1, Km)

        def mmap(b, hg, qi):
            return (b if mask_b_full else 0,
                    hg if mask_h_full else 0,
                    qi if mask_q_full else 0,
                    0)

        in_specs.append(pl.BlockSpec(m_blk, mmap))
        args.append(m)

    out_specs = (
        pl.BlockSpec((1, G, TQ, D), qmap),
        pl.BlockSpec((1, G, TQ, L), qmap),
    )
    out_shape = (
        jax.ShapeDtypeStruct((B, H, Lq, D), out_dtype),
        jax.ShapeDtypeStruct((B, H, Lq, L), score_dt),
    )

    flops = 4 * B * H * Lq * L * D             # q@k^T + probs@v
    transcendentals = B * H * Lq * L           # exp
    bytes_accessed = int(
        (q.size + k.size + v.size) * jnp.dtype(q.dtype).itemsize
        + B * H * Lq * D * jnp.dtype(out_dtype).itemsize
        + B * H * Lq * L * score_dt.itemsize
        + (m.size if has_mask else 0))

    kernel = functools.partial(
        _sdpa_kernel, scale=scale, e=float(e), has_mask=has_mask,
        transpose_k=transpose_k, matmul_dtype=mm_dtype, approx_recip=bool(approx_recip))

    out, score = pl.pallas_call(
        kernel,
        grid=(B, HG, NQ),
        in_specs=in_specs,
        out_specs=out_specs,
        out_shape=out_shape,
        compiler_params=pltpu.CompilerParams(
            dimension_semantics=("parallel", "parallel", "arbitrary"),
            vmem_limit_bytes=vmem_limit),
        cost_estimate=pl.CostEstimate(
            flops=flops, transcendentals=transcendentals,
            bytes_accessed=bytes_accessed),
    )(*args)

    if Lq != L:
        out = out[:, :, :L, :]
        score = score[:, :, :L, :]
    return out, score


# --------------------------------------------------------------------------- reference
def _reference(q, k, v, mask=None, e=-1000000000.0):
    d = k.shape[-1]
    score = jnp.einsum("bhld,bhmd->bhlm", q, k) / math.sqrt(d)
    if mask is not None:
        score = jnp.where(mask == 0, e, score)
    score = jax.nn.softmax(score, axis=-1)
    return jnp.einsum("bhlm,bhmd->bhld", score, v), score


if __name__ == "__main__":
    # Module has no learnable parameters (nn.Softmax only) — nothing to init.
    B, H, L, D = 2, 4, 8, 32
    key = jax.random.PRNGKey(0)
    kq, kk, kv, km = jax.random.split(key, 4)
    q = jax.random.normal(kq, (B, H, L, D), dtype=jnp.float32)
    k = jax.random.normal(kk, (B, H, L, D), dtype=jnp.float32)
    v = jax.random.normal(kv, (B, H, L, D), dtype=jnp.float32)

    # 1) mask=None, exact f32 path
    out, score = scale_dot_product_attention(q, k, v, matmul_dtype=jnp.float32)
    jax.block_until_ready((out, score))
    ref_out, ref_score = _reference(q, k, v)
    assert jnp.allclose(out, ref_out, atol=1e-5), "output mismatch (no mask)"
    assert jnp.allclose(score, ref_score, atol=1e-5), "score mismatch (no mask)"

    # 2) full (B,H,L,L) mask, exact f32 path
    mask = (jax.random.uniform(km, (B, H, L, L)) > 0.3).astype(jnp.int32)
    out_m, score_m = scale_dot_product_attention(q, k, v, mask=mask,
                                                 matmul_dtype=jnp.float32)
    jax.block_until_ready((out_m, score_m))
    ref_out_m, ref_score_m = _reference(q, k, v, mask=mask)
    assert jnp.allclose(out_m, ref_out_m, atol=1e-5), "output mismatch (mask)"
    assert jnp.allclose(score_m, ref_score_m, atol=1e-5), "score mismatch (mask)"

    # 3) broadcast (padding-style) mask, default bf16 MXU path (f32 accumulation):
    #    relaxed tolerance for bf16 quantisation / approximate reciprocal.
    pad_mask = (jax.random.uniform(jax.random.PRNGKey(1), (1, 1, 1, L)) > 0.2
                ).astype(jnp.int32)
    out_b, score_b = scale_dot_product_attention(q, k, v, mask=pad_mask)
    jax.block_until_ready((out_b, score_b))
    ref_out_b, ref_score_b = _reference(q, k, v, mask=pad_mask)
    assert jnp.allclose(out_b, ref_out_b, atol=8e-2), "output mismatch (bf16 path)"
    assert jnp.allclose(score_b, ref_score_b, atol=5e-2), "score mismatch (bf16 path)"

    # 4) L not a multiple of 8: exercises the query-axis padding path, exact f32 + mask.
    L2 = 12
    k2a, k2b, k2c, k2d = jax.random.split(jax.random.PRNGKey(2), 4)
    q2 = jax.random.normal(k2a, (B, H, L2, D), dtype=jnp.float32)
    k2 = jax.random.normal(k2b, (B, H, L2, D), dtype=jnp.float32)
    v2 = jax.random.normal(k2c, (B, H, L2, D), dtype=jnp.float32)
    mask2 = (jax.random.uniform(k2d, (B, H, L2, L2)) > 0.3).astype(jnp.int32)
    out2, score2 = scale_dot_product_attention(q2, k2, v2, mask=mask2,
                                               matmul_dtype=jnp.float32)
    jax.block_until_ready((out2, score2))
    ref_out2, ref_score2 = _reference(q2, k2, v2, mask=mask2)
    assert out2.shape == (B, H, L2, D) and score2.shape == (B, H, L2, L2)
    assert jnp.allclose(out2, ref_out2, atol=1e-5), "output mismatch (padded L)"
    assert jnp.allclose(score2, ref_score2, atol=1e-5), "score mismatch (padded L)"

    print("KERNEL_OK")
</pallas_src>

<mosaic_0001>
module attributes {stable_mosaic.version = 11 : i64} {
  func.func @_sdpa_kernel(%arg0: i32, %arg1: i32, %arg2: i32, %arg3: memref<1x4x8x32xf32, #tpu.memory_space<vmem>>, %arg4: memref<1x4x32x8xf32, #tpu.memory_space<vmem>>, %arg5: memref<1x4x8x32xf32, #tpu.memory_space<vmem>>, %arg6: memref<1x4x8x32xf32, #tpu.memory_space<vmem>>, %arg7: memref<1x4x8x8xf32, #tpu.memory_space<vmem>>) attributes {dimension_semantics = [#tpu.dimension_semantics<parallel>, #tpu.dimension_semantics<parallel>, #tpu.dimension_semantics<arbitrary>], iteration_bounds = array<i64: 2, 1, 1>, scalar_prefetch = 0 : i64, scratch_operands = 0 : i64, tpu.core_type = #tpu.core_type<tc>, window_params = [{transform_indices = @transform_0, window_bounds = array<i64: 1, 4, 8, 32>}, {transform_indices = @transform_1, window_bounds = array<i64: 1, 4, 32, 8>}, {transform_indices = @transform_2, window_bounds = array<i64: 1, 4, 8, 32>}, {transform_indices = @transform_3, window_bounds = array<i64: 1, 4, 8, 32>}, {transform_indices = @transform_4, window_bounds = array<i64: 1, 4, 8, 8>}]} {
    %c0 = arith.constant 0 : index
    %c0_0 = arith.constant 0 : index
    %c0_1 = arith.constant 0 : index
    %c0_2 = arith.constant 0 : index
    %0 = vector.load %arg3[%c0, %c0_0, %c0_1, %c0_2] : memref<1x4x8x32xf32, #tpu.memory_space<vmem>>, vector<1x4x8x32xf32>
    %1 = vector.shape_cast %0 : vector<1x4x8x32xf32> to vector<4x8x32xf32>
    %cst = arith.constant 0.176776692 : f32
    %2 = vector.broadcast %cst : f32 to vector<4x8x32xf32>
    %3 = arith.mulf %1, %2 : vector<4x8x32xf32>
    %c0_3 = arith.constant 0 : index
    %c0_4 = arith.constant 0 : index
    %c0_5 = arith.constant 0 : index
    %c0_6 = arith.constant 0 : index
    %4 = vector.load %arg4[%c0_3, %c0_4, %c0_5, %c0_6] : memref<1x4x32x8xf32, #tpu.memory_space<vmem>>, vector<1x4x32x8xf32>
    %5 = vector.shape_cast %4 : vector<1x4x32x8xf32> to vector<4x32x8xf32>
    %c0_7 = arith.constant 0 : index
    %c0_8 = arith.constant 0 : index
    %c0_9 = arith.constant 0 : index
    %c0_10 = arith.constant 0 : index
    %6 = vector.load %arg5[%c0_7, %c0_8, %c0_9, %c0_10] : memref<1x4x8x32xf32, #tpu.memory_space<vmem>>, vector<1x4x8x32xf32>
    %7 = vector.shape_cast %6 : vector<1x4x8x32xf32> to vector<4x8x32xf32>
    "tpu.trace_start"() <{level = 10 : i32, message = "gqd,gdk->gqk"}> : () -> ()
    %cst_11 = arith.constant dense<0.000000e+00> : vector<4x8x8xf32>
    %8 = tpu.matmul %3, %5, %cst_11 {dimension_numbers = #tpu.dot_dimension_numbers<[2], [1], [1], [2], [0, 0, 0, 1, 1, 2], [0], [0]>} : vector<4x8x32xf32>, vector<4x32x8xf32>, vector<4x8x8xf32> -> vector<4x8x8xf32>
    "tpu.trace_stop"() : () -> ()
    %cst_12 = arith.constant dense<0xFF800000> : vector<4x8xf32>
    %9 = vector.multi_reduction <maximumf>, %8, %cst_12 [2] : vector<4x8x8xf32> to vector<4x8xf32>
    %10 = vector.shape_cast %9 : vector<4x8xf32> to vector<4x8x1xf32>
    %11 = vector.broadcast %10 : vector<4x8x1xf32> to vector<4x8x8xf32>
    %12 = arith.subf %8, %11 : vector<4x8x8xf32>
    %13 = math.exp %12 : vector<4x8x8xf32>
    %cst_13 = arith.constant dense<0.000000e+00> : vector<4x8xf32>
    %14 = vector.multi_reduction <add>, %13, %cst_13 [2] : vector<4x8x8xf32> to vector<4x8xf32>
    %15 = vector.shape_cast %14 : vector<4x8xf32> to vector<4x8x1xf32>
    %16 = tpu.reciprocal %15 : vector<4x8x1xf32> -> vector<4x8x1xf32>
    %17 = vector.broadcast %16 : vector<4x8x1xf32> to vector<4x8x8xf32>
    %18 = arith.mulf %13, %17 : vector<4x8x8xf32>
    "tpu.trace_start"() <{level = 10 : i32, message = "gqk,gkd->gqd"}> : () -> ()
    %cst_14 = arith.constant dense<0.000000e+00> : vector<4x8x32xf32>
    %19 = tpu.matmul %18, %7, %cst_14 {dimension_numbers = #tpu.dot_dimension_numbers<[2], [1], [1], [2], [0, 0, 0, 1, 1, 2], [0], [0]>} : vector<4x8x8xf32>, vector<4x8x32xf32>, vector<4x8x32xf32> -> vector<4x8x32xf32>
    "tpu.trace_stop"() : () -> ()
    %c0_15 = arith.constant 0 : index
    %c0_16 = arith.constant 0 : index
    %c0_17 = arith.constant 0 : index
    %c0_18 = arith.constant 0 : index
    %20 = vector.load %arg6[%c0_15, %c0_16, %c0_17, %c0_18] : memref<1x4x8x32xf32, #tpu.memory_space<vmem>>, vector<1x4x8x32xf32>
    %21 = vector.shape_cast %20 : vector<1x4x8x32xf32> to vector<4x8x32xf32>
    %22 = vector.shape_cast %19 : vector<4x8x32xf32> to vector<1x4x8x32xf32>
    tpu.vector_store %arg6[%c0_15, %c0_16, %c0_17, %c0_18], %22 {strides = array<i32>} : memref<1x4x8x32xf32, #tpu.memory_space<vmem>>, vector<1x4x8x32xf32>,
    %c0_19 = arith.constant 0 : index
    %c0_20 = arith.constant 0 : index
    %c0_21 = arith.constant 0 : index
    %c0_22 = arith.constant 0 : index
    %23 = vector.load %arg7[%c0_19, %c0_20, %c0_21, %c0_22] : memref<1x4x8x8xf32, #tpu.memory_space<vmem>>, vector<1x4x8x8xf32>
    %24 = vector.shape_cast %23 : vector<1x4x8x8xf32> to vector<4x8x8xf32>
    %25 = vector.shape_cast %18 : vector<4x8x8xf32> to vector<1x4x8x8xf32>
    tpu.vector_store %arg7[%c0_19, %c0_20, %c0_21, %c0_22], %25 {strides = array<i32>} : memref<1x4x8x8xf32, #tpu.memory_space<vmem>>, vector<1x4x8x8xf32>,
    return
  }
  func.func @transform_0(%arg0: i32, %arg1: i32, %arg2: i32) -> (i32, i32, i32, i32) {
    %c0_i32 = arith.constant 0 : i32
    %c0_i32_0 = arith.constant 0 : i32
    return %arg0, %arg1, %arg2, %c0_i32 : i32, i32, i32, i32
  }
  func.func @transform_1(%arg0: i32, %arg1: i32, %arg2: i32) -> (i32, i32, i32, i32) {
    %c0_i32 = arith.constant 0 : i32
    %c0_i32_0 = arith.constant 0 : i32
    %c0_i32_1 = arith.constant 0 : i32
    return %arg0, %arg1, %c0_i32, %c0_i32_0 : i32, i32, i32, i32
  }
  func.func @transform_2(%arg0: i32, %arg1: i32, %arg2: i32) -> (i32, i32, i32, i32) {
    %c0_i32 = arith.constant 0 : i32
    %c0_i32_0 = arith.constant 0 : i32
    %c0_i32_1 = arith.constant 0 : i32
    return %arg0, %arg1, %c0_i32, %c0_i32_0 : i32, i32, i32, i32
  }
  func.func @transform_3(%arg0: i32, %arg1: i32, %arg2: i32) -> (i32, i32, i32, i32) {
    %c0_i32 = arith.constant 0 : i32
    %c0_i32_0 = arith.constant 0 : i32
    return %arg0, %arg1, %arg2, %c0_i32 : i32, i32, i32, i32
  }
  func.func @transform_4(%arg0: i32, %arg1: i32, %arg2: i32) -> (i32, i32, i32, i32) {
    %c0_i32 = arith.constant 0 : i32
    %c0_i32_0 = arith.constant 0 : i32
    return %arg0, %arg1, %arg2, %c0_i32 : i32, i32, i32, i32
  }
}

</mosaic_0001>

<llo_original>
// kernel: tpu_custom_call.1
$region0: #{tpu_custom_call.1}
  #allocation0 [shape = 'u32[]', space=smem, size = 0x4, offset = 0x4, fixed_abs, tag = 'smem constant byte address 0x4 - core index']
  #allocation1 [shape = 'u32[144,128]{1,0:T(1,128)}', space=vmem, size = 0x12000, scoped, tag = 'internal scratch']
  %s0 = inlined_call_operand.vmem [shape: f32[2,4,8,32], index: 0, kind: input, shape index: {}]
  %s1 = inlined_call_operand.vmem [shape: f32[2,4,32,8], index: 1, kind: input, shape index: {}]
  %s2 = inlined_call_operand.vmem [shape: f32[2,4,8,32], index: 2, kind: input, shape index: {}]
  %s3 = inlined_call_operand.hbm [shape: f32[2,4,8,32], index: 3, kind: output, shape index: {0}]
  %s4 = inlined_call_operand.hbm [shape: f32[2,4,8,8], index: 4, kind: output, shape index: {1}]
  %5 = xla_tuple %s3, %s4
  %s6 = sld [smem:[#allocation0]]
  $region53: #{tpu_custom_call.1} parent=0
    _
  %s8 = ssub.s32 1, %s6
  %s9 = scalar_select 0, %s8, %s6
  $region1: #{tpu_custom_call.1} parent=0
    #allocation2 [shape = 'u8[32768]{0}', space=vmem, size = 0x8000, scoped, tag = 'output window, operand 0']
    #allocation3 [shape = 's32[2]{0}', space=sflag, size = 0x8, scoped, tag = 'scoped memory for tpu_custom_call.1']
    #allocation4 [shape = 'u8[32768]{0}', space=vmem, size = 0x8000, scoped, tag = 'output window, operand 1']
    #allocation5 [shape = 's32[2]{0}', space=sflag, size = 0x8, scoped, tag = 'scoped memory for tpu_custom_call.1']
    %10 = vsyncpa [#allocation3], 0
    %s11 = scalar_lea.sflag [#allocation3], 1
    %12 = vsyncpa %s11, 0
    %13 = vsyncpa [#allocation5], 0
    %s14 = scalar_lea.sflag [#allocation5], 1
    %15 = vsyncpa %s14, 0
    loop: start=0, step=1, limit=4
    $region2: #{tpu_custom_call.1} parent=1 // loop_pre_header
      _
    $region3: #{tpu_custom_call.1} parent=1 // loop_header
      %s17 = sphi 0, %s21
      %p18 = scmp.ge.s32.totalorder %s17, 4
      %s24 = sphi 0, %s43
      %s25 = sphi 0, %s39
      %s26 = sphi 0, %s35
      %s27 = sphi 0, %s24
      %s28 = sphi 0, %s25
      %s29 = sphi 0, %s26
      %s30 = sphi 0, %s27
      %s31 = sphi 0, %s28
      %s32 = sphi 0, %s29
      %s50 = sphi 0, %s52
      %s53 = sphi 0, %s50
      %s54 = sphi 0, %s53
      %s70 = sphi 0, %s54
      %s78 = sphi 0, %s80
      %s81 = sphi 0, %s78
      %s82 = sphi 0, %s81
      %s98 = sphi 0, %s82
      %s106 = sphi 0, %s108
      %s109 = sphi 0, %s106
      %s110 = sphi 0, %s109
      %s126 = sphi 0, %s110
      %s136 = sphi 0, %s138
      %s139 = sphi 0, %s136
      %s140 = sphi 0, %s139
      %s156 = sphi 0, %s140
      %s166 = sphi 0, %s168
      %s169 = sphi 0, %s166
      %s170 = sphi 0, %s169
      %s186 = sphi 0, %s170
    $region4: #{tpu_custom_call.1} parent=1 // loop_header_branch
      %20 = sbr.rel (%p18) target = $region8
    $region5: #{tpu_custom_call.1} parent=1 // loop_body
      %s22 = ssub.s32 %s17, 1
      %s23 = ssub.s32 %s17, 2
      %s33 = sadd.s32 1, %s26
      %p34 = scmp.ge.s32.totalorder %s33, 1
      %s35 = scalar_select %p34, 0, %s33
      %s36 = sadd.s32 1, %s25
      %s37 = scalar_select %p34, %s36, %s25
      %p38 = scmp.ge.s32.totalorder %s37, 1
      %s39 = scalar_select %p38, 0, %s37
      %s40 = sadd.s32 1, %s24
      %s41 = scalar_select %p38, %s40, %s24
      %p42 = scmp.ge.s32.totalorder %s41, 2
      %s43 = scalar_select %p42, 0, %s41
      %s44 = ssub.s32 %s24, %s43
      %s45 = ssub.s32 %s25, %s39
      %s46 = sor.u32 %s44, %s45
      %s47 = ssub.s32 %s26, %s35
      %s48 = sor.u32 %s46, %s47
      %p49 = scmp.eq.s32.totalorder %s48, 0
      %s51 = sadd.s32 %s50, 1
      %s52 = scalar_select %p49, %s50, %s51
      %p55 = pneg %p49
      %p56 = scmp.eq.s32.totalorder %s17, 1
      %p57 = por %p55, %p56
      %p58 = scmp.ne.s32.totalorder %s50, %s53
      %p59 = scmp.eq.s32.totalorder %s17, 0
      %p60 = por %p58, %p59
      %p61 = scmp.ne.s32.totalorder %s50, %s53
      %p62 = scmp.eq.s32.totalorder %s22, 1
      %p63 = por %p61, %p62
      %p64 = scmp.ne.s32.totalorder %s53, %s54
      %p65 = scmp.eq.s32.totalorder %s22, 0
      %p66 = por %p64, %p65
      %p67 = scmp.ne.s32.totalorder %s53, %s54
      %p68 = scmp.eq.s32.totalorder %s23, 1
      %p69 = por %p67, %p68
      %p71 = scmp.ne.s32.totalorder %s54, %s70
      %p72 = scmp.eq.s32.totalorder %s23, 0
      %p73 = por %p71, %p72
      %s74 = ssub.s32 %s24, %s43
      %s75 = ssub.s32 %s25, %s39
      %s76 = sor.u32 %s74, %s75
      %p77 = scmp.eq.s32.totalorder %s76, 0
      %s79 = sadd.s32 %s78, 1
      %s80 = scalar_select %p77, %s78, %s79
      %p83 = pneg %p77
      %p84 = scmp.eq.s32.totalorder %s17, 1
      %p85 = por %p83, %p84
      %p86 = scmp.ne.s32.totalorder %s78, %s81
      %p87 = scmp.eq.s32.totalorder %s17, 0
      %p88 = por %p86, %p87
      %p89 = scmp.ne.s32.totalorder %s78, %s81
      %p90 = scmp.eq.s32.totalorder %s22, 1
      %p91 = por %p89, %p90
      %p92 = scmp.ne.s32.totalorder %s81, %s82
      %p93 = scmp.eq.s32.totalorder %s22, 0
      %p94 = por %p92, %p93
      %p95 = scmp.ne.s32.totalorder %s81, %s82
      %p96 = scmp.eq.s32.totalorder %s23, 1
      %p97 = por %p95, %p96
      %p99 = scmp.ne.s32.totalorder %s82, %s98
      %p100 = scmp.eq.s32.totalorder %s23, 0
      %p101 = por %p99, %p100
      %s102 = ssub.s32 %s24, %s43
      %s103 = ssub.s32 %s25, %s39
      %s104 = sor.u32 %s102, %s103
      %p105 = scmp.eq.s32.totalorder %s104, 0
      %s107 = sadd.s32 %s106, 1
      %s108 = scalar_select %p105, %s106, %s107
      %p111 = pneg %p105
      %p112 = scmp.eq.s32.totalorder %s17, 1
      %p113 = por %p111, %p112
      %p114 = scmp.ne.s32.totalorder %s106, %s109
      %p115 = scmp.eq.s32.totalorder %s17, 0
      %p116 = por %p114, %p115
      %p117 = scmp.ne.s32.totalorder %s106, %s109
      %p118 = scmp.eq.s32.totalorder %s22, 1
      %p119 = por %p117, %p118
      %p120 = scmp.ne.s32.totalorder %s109, %s110
      %p121 = scmp.eq.s32.totalorder %s22, 0
      %p122 = por %p120, %p121
      %p123 = scmp.ne.s32.totalorder %s109, %s110
      %p124 = scmp.eq.s32.totalorder %s23, 1
      %p125 = por %p123, %p124
      %p127 = scmp.ne.s32.totalorder %s110, %s126
      %p128 = scmp.eq.s32.totalorder %s23, 0
      %p129 = por %p127, %p128
      %s130 = ssub.s32 %s24, %s43
      %s131 = ssub.s32 %s25, %s39
      %s132 = sor.u32 %s130, %s131
      %s133 = ssub.s32 %s26, %s35
      %s134 = sor.u32 %s132, %s133
      %p135 = scmp.eq.s32.totalorder %s134, 0
      %s137 = sadd.s32 %s136, 1
      %s138 = scalar_select %p135, %s136, %s137
      %p141 = pneg %p135
      %p142 = scmp.eq.s32.totalorder %s17, 1
      %p143 = por %p141, %p142
      %p144 = scmp.ne.s32.totalorder %s136, %s139
      %p145 = scmp.eq.s32.totalorder %s17, 0
      %p146 = por %p144, %p145
      %p147 = scmp.ne.s32.totalorder %s136, %s139
      %p148 = scmp.eq.s32.totalorder %s22, 1
      %p149 = por %p147, %p148
      %p150 = scmp.ne.s32.totalorder %s139, %s140
      %p151 = scmp.eq.s32.totalorder %s22, 0
      %p152 = por %p150, %p151
      %p153 = scmp.ne.s32.totalorder %s139, %s140
      %p154 = scmp.eq.s32.totalorder %s23, 1
      %p155 = por %p153, %p154
      %p157 = scmp.ne.s32.totalorder %s140, %s156
      %p158 = scmp.eq.s32.totalorder %s23, 0
      %p159 = por %p157, %p158
      %s160 = ssub.s32 %s24, %s43
      %s161 = ssub.s32 %s25, %s39
      %s162 = sor.u32 %s160, %s161
      %s163 = ssub.s32 %s26, %s35
      %s164 = sor.u32 %s162, %s163
      %p165 = scmp.eq.s32.totalorder %s164, 0
      %s167 = sadd.s32 %s166, 1
      %s168 = scalar_select %p165, %s166, %s167
      %p171 = pneg %p165
      %p172 = scmp.eq.s32.totalorder %s17, 1
      %p173 = por %p171, %p172
      %p174 = scmp.ne.s32.totalorder %s166, %s169
      %p175 = scmp.eq.s32.totalorder %s17, 0
      %p176 = por %p174, %p175
      %p177 = scmp.ne.s32.totalorder %s166, %s169
      %p178 = scmp.eq.s32.totalorder %s22, 1
      %p179 = por %p177, %p178
      %p180 = scmp.ne.s32.totalorder %s169, %s170
      %p181 = scmp.eq.s32.totalorder %s22, 0
      %p182 = por %p180, %p181
      %p183 = scmp.ne.s32.totalorder %s169, %s170
      %p184 = scmp.eq.s32.totalorder %s23, 1
      %p185 = por %p183, %p184
      %p187 = scmp.ne.s32.totalorder %s170, %s186
      %p188 = scmp.eq.s32.totalorder %s23, 0
      %p189 = por %p187, %p188
      %p190 = scmp.le.s32.totalorder 1, %s17
      %p191 = scmp.lt.s32.totalorder %s17, 3
      %p192 = pnand %p190, %p191
      %p193 = pneg %p192
      // Predicated region
      $region9: #{tpu_custom_call.1} parent=5 // pred_check
        _
      $region10: #{tpu_custom_call.1} parent=5 // pred_check_branch
        %195 = sbr.rel (%p192) target = $region12
      $region11: #{tpu_custom_call.1} parent=5 // pred_region
        %s196 = ssub.s32 %s17, 1
      $region12: #{tpu_custom_call.1} parent=5 // pred_fallthru
        _
      %p197 = scmp.lt.s32.totalorder %s17, 2
      // Predicated region
      $region13: #{tpu_custom_call.1} parent=5 // pred_check
        %p198 = pneg %p197
      $region14: #{tpu_custom_call.1} parent=5 // pred_check_branch
        %200 = sbr.rel (%p198) target = $region16
      $region15: #{tpu_custom_call.1} parent=5 // pred_region
        // Predicated region
        $region17: #{tpu_custom_call.1} parent=15 // pred_check
          %p201 = pneg %p60
        $region18: #{tpu_custom_call.1} parent=15 // pred_check_branch
          %203 = sbr.rel (%p201) target = $region20
        $region19: #{tpu_custom_call.1} parent=15 // pred_region
          %s204 = smul.u32 4, %s25
          %p205 = scmp.lt.s32.totalorder %s24, 1
          %s206 = scalar_select %p205, %s24, 1
          %p207 = scmp.lt.s32.totalorder %s204, 3
          %s208 = scalar_select %p207, %s204, 3
          %p209 = scmp.lt.s32.totalorder %s26, 0
          %s210 = scalar_select %p209, %s26, 0
          %s211 = sadd.s32 %s210, %s208
          %s212 = smul.addr %s206, 4
          %s213 = sadd.s32 %s211, %s212
          %s214 = smul.addr %s213, 8
          %s215 = scalar_lea.vmem %s0, %s214
          %s216 = smul.u32 4, %s25
        $region20: #{tpu_custom_call.1} parent=15 // pred_fallthru
          _
        // Predicated region
        $region21: #{tpu_custom_call.1} parent=15 // pred_check
          %p217 = pneg %p88
        $region22: #{tpu_custom_call.1} parent=15 // pred_check_branch
          %219 = sbr.rel (%p217) target = $region24
        $region23: #{tpu_custom_call.1} parent=15 // pred_region
          %s220 = smul.u32 4, %s25
          %p221 = scmp.lt.s32.totalorder %s24, 1
          %s222 = scalar_select %p221, %s24, 1
          %p223 = scmp.lt.s32.totalorder %s220, 3
          %s224 = scalar_select %p223, %s220, 3
          %s225 = smul.addr %s224, 4
          %s226 = smul.addr %s222, 16
          %s227 = sadd.s32 %s225, %s226
          %s228 = smul.addr %s227, 8
          %s229 = scalar_lea.vmem %s1, %s228
          %s230 = smul.u32 4, %s25
        $region24: #{tpu_custom_call.1} parent=15 // pred_fallthru
          _
        // Predicated region
        $region25: #{tpu_custom_call.1} parent=15 // pred_check
          %p231 = pneg %p116
        $region26: #{tpu_custom_call.1} parent=15 // pred_check_branch
          %233 = sbr.rel (%p231) target = $region28
        $region27: #{tpu_custom_call.1} parent=15 // pred_region
          %s234 = smul.u32 4, %s25
          %p235 = scmp.lt.s32.totalorder %s24, 1
          %s236 = scalar_select %p235, %s24, 1
          %p237 = scmp.lt.s32.totalorder %s234, 3
          %s238 = scalar_select %p237, %s234, 3
          %s239 = smul.addr %s236, 4
          %s240 = sadd.s32 %s238, %s239
          %s241 = smul.addr %s240, 8
          %s242 = scalar_lea.vmem %s2, %s241
          %s243 = smul.u32 4, %s25
        $region28: #{tpu_custom_call.1} parent=15 // pred_fallthru
          _
      $region16: #{tpu_custom_call.1} parent=5 // pred_fallthru
        _
      %p244 = scmp.le.s32.totalorder 1, %s17
      %p245 = scmp.lt.s32.totalorder %s17, 3
      %p246 = pnand %p244, %p245
      %p247 = pneg %p246
      // Predicated region
      $region29: #{tpu_custom_call.1} parent=5 // pred_check
        _
      $region30: #{tpu_custom_call.1} parent=5 // pred_check_branch
        %249 = sbr.rel (%p246) target = $region32
      $region31: #{tpu_custom_call.1} parent=5 // pred_region
        %s250 = ssub.s32 %s17, 1
        %s251 = smul.u32 4, %s28
        %p252 = scmp.lt.s32.totalorder %s27, 1
        %s253 = scalar_select %p252, %s27, 1
        %p254 = scmp.lt.s32.totalorder %s251, 3
        %s255 = scalar_select %p254, %s251, 3
        %p256 = scmp.lt.s32.totalorder %s29, 0
        %s257 = scalar_select %p256, %s29, 0
        %s258 = sadd.s32 %s257, %s255
        %s259 = smul.addr %s253, 4
        %s260 = sadd.s32 %s258, %s259
        %s261 = smul.addr %s260, 8
        %s262 = scalar_lea.vmem %s0, %s261
        %p263 = pneg %p66
        %p264 = pneg %p63
        %s265 = smul.u32 4, %s28
        %p266 = scmp.lt.s32.totalorder %s27, 1
        %s267 = scalar_select %p266, %s27, 1
        %p268 = scmp.lt.s32.totalorder %s265, 3
        %s269 = scalar_select %p268, %s265, 3
        %s270 = smul.addr %s269, 4
        %s271 = smul.addr %s267, 16
        %s272 = sadd.s32 %s270, %s271
        %s273 = smul.addr %s272, 8
        %s274 = scalar_lea.vmem %s1, %s273
        %p275 = pneg %p94
        %p276 = pneg %p91
        %s277 = smul.u32 4, %s28
        %p278 = scmp.lt.s32.totalorder %s27, 1
        %s279 = scalar_select %p278, %s27, 1
        %p280 = scmp.lt.s32.totalorder %s277, 3
        %s281 = scalar_select %p280, %s277, 3
        %s282 = smul.addr %s279, 4
        %s283 = sadd.s32 %s281, %s282
        %s284 = smul.addr %s283, 8
        %s285 = scalar_lea.vmem %s2, %s284
        %p286 = pneg %p122
        %p287 = pneg %p119
        %p288 = pneg %p152
        %p289 = pneg %p149
        %s290 = sand.u32 %s139, 1
        %s291 = scalar_lea.sflag [#allocation3], %s290
        %s292 = sand.u32 %s139, 1
        %s293 = smul.addr %s292, 32
        %s294 = scalar_lea.vmem [#allocation2], %s293
        %p295 = pneg %p182
        %p296 = pneg %p179
        %s297 = sand.u32 %s169, 1
        %s298 = scalar_lea.sflag [#allocation5], %s297
        %s299 = sand.u32 %s169, 1
        %s300 = smul.addr %s299, 32
        %s301 = scalar_lea.vmem [#allocation4], %s300
        %s302 = smul.u32 4, %s28
        %p303 = scmp.lt.s32.totalorder %s27, 1
        %s304 = scalar_select %p303, %s27, 1
        %p305 = scmp.lt.s32.totalorder %s302, 3
        %s306 = scalar_select %p305, %s302, 3
        %p307 = scmp.lt.s32.totalorder %s29, 0
        %s308 = scalar_select %p307, %s29, 0
        %s309 = sadd.s32 %s308, %s306
        %s310 = smul.addr %s304, 4
        %s311 = sadd.s32 %s309, %s310
        %s312 = smul.addr %s311, 8
        %s313 = scalar_lea.vmem %s0, %s312
        %s314 = smul.u32 4, %s28
        %s315 = smul.u32 4, %s28
        %p316 = scmp.lt.s32.totalorder %s27, 1
        %s317 = scalar_select %p316, %s27, 1
        %p318 = scmp.lt.s32.totalorder %s315, 3
        %s319 = scalar_select %p318, %s315, 3
        %s320 = smul.addr %s319, 4
        %s321 = smul.addr %s317, 16
        %s322 = sadd.s32 %s320, %s321
        %s323 = smul.addr %s322, 8
        %s324 = scalar_lea.vmem %s1, %s323
        %s325 = smul.u32 4, %s28
        %s326 = smul.u32 4, %s28
        %p327 = scmp.lt.s32.totalorder %s27, 1
        %s328 = scalar_select %p327, %s27, 1
        %p329 = scmp.lt.s32.totalorder %s326, 3
        %s330 = scalar_select %p329, %s326, 3
        %s331 = smul.addr %s328, 4
        %s332 = sadd.s32 %s330, %s331
        %s333 = smul.addr %s332, 8
        %s334 = scalar_lea.vmem %s2, %s333
        %s335 = smul.u32 4, %s28
        %s336 = smul.u32 4, %s28
        %s337 = smul.u32 4, %s28
        %v338 = vld [vmem:[%s313] sm:$0xff]
        %v339 = vld [vmem:[%s313 + $0x8] sm:$0xff]
        %v340 = vld [vmem:[%s313 + $0x10] sm:$0xff]
        %v341 = vld [vmem:[%s313 + $0x18] sm:$0xff]
        %v342 = vmul.f32 %v338, 0.17677669
        %v343 = vmul.f32 %v339, 0.17677669
        %v344 = vmul.f32 %v340, 0.17677669
        %v345 = vmul.f32 %v341, 0.17677669
        %v346 = vld [vmem:[%s324] sm:$0xff]
        %v347 = vld [vmem:[%s324 + $0x8] sm:$0xff]
        %v348 = vld [vmem:[%s324 + $0x10] sm:$0xff]
        %v349 = vld [vmem:[%s324 + $0x18] sm:$0xff]
        %v350 = vld [vmem:[%s324 + $0x20] sm:$0xff]
        %v351 = vld [vmem:[%s324 + $0x28] sm:$0xff]
        %v352 = vld [vmem:[%s324 + $0x30] sm:$0xff]
        %v353 = vld [vmem:[%s324 + $0x38] sm:$0xff]
        %v354 = vld [vmem:[%s324 + $0x40] sm:$0xff]
        %v355 = vld [vmem:[%s324 + $0x48] sm:$0xff]
        %v356 = vld [vmem:[%s324 + $0x50] sm:$0xff]
        %v357 = vld [vmem:[%s324 + $0x58] sm:$0xff]
        %v358 = vld [vmem:[%s324 + $0x60] sm:$0xff]
        %v359 = vld [vmem:[%s324 + $0x68] sm:$0xff]
        %v360 = vld [vmem:[%s324 + $0x70] sm:$0xff]
        %v361 = vld [vmem:[%s324 + $0x78] sm:$0xff]
        %v362 = vld [vmem:[%s334] sm:$0xff]
        %v363 = vld [vmem:[%s334 + $0x8] sm:$0xff]
        %v364 = vld [vmem:[%s334 + $0x10] sm:$0xff]
        %v365 = vld [vmem:[%s334 + $0x18] sm:$0xff]
        %vm366 = vcmask 261120
        %v368 = vsel %vm366, %v342, 0
        %370 = vmatprep.subr.mxu0 0.0
        %371 = vmatpush1.msra.mxu0 %v346
        %372 = vmatprep.subr.mxu0 0.0
        %373 = vmatpush1.msra.mxu0 %v347
        %374 = vmatprep.subr.mxu0 0.0
        %375 = vmatpush1.msra.mxu0 %v348
        %376 = vmatprep.subr.mxu0 0.0
        %377 = vmatpush1.msra.mxu0 %v349
        %378 = vmatprep.subr.mxu0 0.0
        %379 = vmatpush1.msra.mxu0 0.0
        %380 = vmatprep.subr.mxu0 0.0
        %381 = vmatpush1.msra.mxu0 0.0
        %382 = vmatprep.subr.mxu0 0.0
        %383 = vmatpush1.msra.mxu0 0.0
        %384 = vmatprep.subr.mxu0 0.0
        %385 = vmatpush1.msra.mxu0 0.0
        %386 = vmatprep.subr.mxu0 0.0
        %387 = vmatpush1.msra.mxu0 0.0
        %388 = vmatprep.subr.mxu0 0.0
        %389 = vmatpush1.msra.mxu0 0.0
        %390 = vmatprep.subr.mxu0 0.0
        %391 = vmatpush1.msra.mxu0 0.0
        %392 = vmatprep.subr.mxu0 0.0
        %393 = vmatpush1.msra.mxu0 0.0
        %394 = vmatprep.subr.mxu0 0.0
        %395 = vmatpush1.msra.mxu0 0.0
        %396 = vmatprep.subr.mxu0 0.0
        %397 = vmatpush1.msra.mxu0 0.0
        %398 = vmatprep.subr.mxu0 0.0
        %399 = vmatpush1.msra.mxu0 0.0
        %400 = vmatprep.subr.mxu0 0.0
        %401 = vmatpush1.msra.mxu0 0.0
        %402 = vmatprep.subr.mxu0 0.0
        %403 = vmatpush1.msra.mxu0 0.0
        %404 = vmatprep.subr.mxu0 0.0
        %405 = vmatpush1.msra.mxu0 0.0
        %406 = vmatprep.subr.mxu0 0.0
        %407 = vmatpush1.msra.mxu0 0.0
        %408 = vmatprep.subr.mxu0 0.0
        %409 = vmatpush1.msra.mxu0 0.0
        %410 = vmatprep.subr.mxu0 0.0
        %411 = vmatpush1.msra.mxu0 0.0
        %412 = vmatprep.subr.mxu0 0.0
        %413 = vmatpush1.msra.mxu0 0.0
        %414 = vmatprep.subr.mxu0 0.0
        %415 = vmatpush1.msra.mxu0 0.0
        %416 = vmatprep.subr.mxu0 0.0
        %417 = vmatpush1.msra.mxu0 0.0
        %418 = vmatprep.subr.mxu0 0.0
        %419 = vmatpush1.msra.mxu0 0.0
        %420 = vmatprep.subr.mxu0 0.0
        %421 = vmatpush1.msra.mxu0 0.0
        %422 = vmatprep.subr.mxu0 0.0
        %423 = vmatpush1.msra.mxu0 0.0
        %424 = vmatprep.subr.mxu0 0.0
        %425 = vmatpush1.msra.mxu0 0.0
        %426 = vmatprep.subr.mxu0 0.0
        %427 = vmatpush1.msra.mxu0 0.0
        %428 = vmatprep.subr.mxu0 0.0
        %429 = vmatpush1.msra.mxu0 0.0
        %430 = vmatprep.subr.mxu0 0.0
        %431 = vmatpush1.msra.mxu0 0.0
        %432 = vmatprep.subr.mxu0 0.0
        %433 = vmatpush1.msra.mxu0 0.0
        %434 = vmatprep.mubr.f32.mxu0 0.0
        %435 = vmatmul.mubr.f32.gmra.mrb[0].mxu0 %v368
        %v436 = vpop.f32.mrb[0].mxu0
        %v437 = vadd.f32 0.0, %v436
        %v438 = vpop.f32.mrb[0].mxu0
        %439 = vdwg.mxu0
        %v441 = vsel %vm366, %v343, 0
        %443 = vmatprep.subr.mxu0 0.0
        %444 = vmatpush1.msra.mxu0 %v350
        %445 = vmatprep.subr.mxu0 0.0
        %446 = vmatpush1.msra.mxu0 %v351
        %447 = vmatprep.subr.mxu0 0.0
        %448 = vmatpush1.msra.mxu0 %v352
        %449 = vmatprep.subr.mxu0 0.0
        %450 = vmatpush1.msra.mxu0 %v353
        %451 = vmatprep.subr.mxu0 0.0
        %452 = vmatpush1.msra.mxu0 0.0
        %453 = vmatprep.subr.mxu0 0.0
        %454 = vmatpush1.msra.mxu0 0.0
        %455 = vmatprep.subr.mxu0 0.0
        %456 = vmatpush1.msra.mxu0 0.0
        %457 = vmatprep.subr.mxu0 0.0
        %458 = vmatpush1.msra.mxu0 0.0
        %459 = vmatprep.subr.mxu0 0.0
        %460 = vmatpush1.msra.mxu0 0.0
        %461 = vmatprep.subr.mxu0 0.0
        %462 = vmatpush1.msra.mxu0 0.0
        %463 = vmatprep.subr.mxu0 0.0
        %464 = vmatpush1.msra.mxu0 0.0
        %465 = vmatprep.subr.mxu0 0.0
        %466 = vmatpush1.msra.mxu0 0.0
        %467 = vmatprep.subr.mxu0 0.0
        %468 = vmatpush1.msra.mxu0 0.0
        %469 = vmatprep.subr.mxu0 0.0
        %470 = vmatpush1.msra.mxu0 0.0
        %471 = vmatprep.subr.mxu0 0.0
        %472 = vmatpush1.msra.mxu0 0.0
        %473 = vmatprep.subr.mxu0 0.0
        %474 = vmatpush1.msra.mxu0 0.0
        %475 = vmatprep.subr.mxu0 0.0
        %476 = vmatpush1.msra.mxu0 0.0
        %477 = vmatprep.subr.mxu0 0.0
        %478 = vmatpush1.msra.mxu0 0.0
        %479 = vmatprep.subr.mxu0 0.0
        %480 = vmatpush1.msra.mxu0 0.0
        %481 = vmatprep.subr.mxu0 0.0
        %482 = vmatpush1.msra.mxu0 0.0
        %483 = vmatprep.subr.mxu0 0.0
        %484 = vmatpush1.msra.mxu0 0.0
        %485 = vmatprep.subr.mxu0 0.0
        %486 = vmatpush1.msra.mxu0 0.0
        %487 = vmatprep.subr.mxu0 0.0
        %488 = vmatpush1.msra.mxu0 0.0
        %489 = vmatprep.subr.mxu0 0.0
        %490 = vmatpush1.msra.mxu0 0.0
        %491 = vmatprep.subr.mxu0 0.0
        %492 = vmatpush1.msra.mxu0 0.0
        %493 = vmatprep.subr.mxu0 0.0
        %494 = vmatpush1.msra.mxu0 0.0
        %495 = vmatprep.subr.mxu0 0.0
        %496 = vmatpush1.msra.mxu0 0.0
        %497 = vmatprep.subr.mxu0 0.0
        %498 = vmatpush1.msra.mxu0 0.0
        %499 = vmatprep.subr.mxu0 0.0
        %500 = vmatpush1.msra.mxu0 0.0
        %501 = vmatprep.subr.mxu0 0.0
        %502 = vmatpush1.msra.mxu0 0.0
        %503 = vmatprep.subr.mxu0 0.0
        %504 = vmatpush1.msra.mxu0 0.0
        %505 = vmatprep.subr.mxu0 0.0
        %506 = vmatpush1.msra.mxu0 0.0
        %507 = vmatprep.mubr.f32.mxu0 0.0
        %508 = vmatmul.mubr.f32.gmra.mrb[0].mxu0 %v441
        %v509 = vpop.f32.mrb[0].mxu0
        %v510 = vadd.f32 0.0, %v509
        %v511 = vpop.f32.mrb[0].mxu0
        %512 = vdwg.mxu0
        %v514 = vsel %vm366, %v344, 0
        %516 = vmatprep.subr.mxu0 0.0
        %517 = vmatpush1.msra.mxu0 %v354
        %518 = vmatprep.subr.mxu0 0.0
        %519 = vmatpush1.msra.mxu0 %v355
        %520 = vmatprep.subr.mxu0 0.0
        %521 = vmatpush1.msra.mxu0 %v356
        %522 = vmatprep.subr.mxu0 0.0
        %523 = vmatpush1.msra.mxu0 %v357
        %524 = vmatprep.subr.mxu0 0.0
        %525 = vmatpush1.msra.mxu0 0.0
        %526 = vmatprep.subr.mxu0 0.0
        %527 = vmatpush1.msra.mxu0 0.0
        %528 = vmatprep.subr.mxu0 0.0
        %529 = vmatpush1.msra.mxu0 0.0
        %530 = vmatprep.subr.mxu0 0.0
        %531 = vmatpush1.msra.mxu0 0.0
        %532 = vmatprep.subr.mxu0 0.0
        %533 = vmatpush1.msra.mxu0 0.0
        %534 = vmatprep.subr.mxu0 0.0
        %535 = vmatpush1.msra.mxu0 0.0
        %536 = vmatprep.subr.mxu0 0.0
        %537 = vmatpush1.msra.mxu0 0.0
        %538 = vmatprep.subr.mxu0 0.0
        %539 = vmatpush1.msra.mxu0 0.0
        %540 = vmatprep.subr.mxu0 0.0
        %541 = vmatpush1.msra.mxu0 0.0
        %542 = vmatprep.subr.mxu0 0.0
        %543 = vmatpush1.msra.mxu0 0.0
        %544 = vmatprep.subr.mxu0 0.0
        %545 = vmatpush1.msra.mxu0 0.0
        %546 = vmatprep.subr.mxu0 0.0
        %547 = vmatpush1.msra.mxu0 0.0
        %548 = vmatprep.subr.mxu0 0.0
        %549 = vmatpush1.msra.mxu0 0.0
        %550 = vmatprep.subr.mxu0 0.0
        %551 = vmatpush1.msra.mxu0 0.0
        %552 = vmatprep.subr.mxu0 0.0
        %553 = vmatpush1.msra.mxu0 0.0
        %554 = vmatprep.subr.mxu0 0.0
        %555 = vmatpush1.msra.mxu0 0.0
        %556 = vmatprep.subr.mxu0 0.0
        %557 = vmatpush1.msra.mxu0 0.0
        %558 = vmatprep.subr.mxu0 0.0
        %559 = vmatpush1.msra.mxu0 0.0
        %560 = vmatprep.subr.mxu0 0.0
        %561 = vmatpush1.msra.mxu0 0.0
        %562 = vmatprep.subr.mxu0 0.0
        %563 = vmatpush1.msra.mxu0 0.0
        %564 = vmatprep.subr.mxu0 0.0
        %565 = vmatpush1.msra.mxu0 0.0
        %566 = vmatprep.subr.mxu0 0.0
        %567 = vmatpush1.msra.mxu0 0.0
        %568 = vmatprep.subr.mxu0 0.0
        %569 = vmatpush1.msra.mxu0 0.0
        %570 = vmatprep.subr.mxu0 0.0
        %571 = vmatpush1.msra.mxu0 0.0
        %572 = vmatprep.subr.mxu0 0.0
        %573 = vmatpush1.msra.mxu0 0.0
        %574 = vmatprep.subr.mxu0 0.0
        %575 = vmatpush1.msra.mxu0 0.0
        %576 = vmatprep.subr.mxu0 0.0
        %577 = vmatpush1.msra.mxu0 0.0
        %578 = vmatprep.subr.mxu0 0.0
        %579 = vmatpush1.msra.mxu0 0.0
        %580 = vmatprep.mubr.f32.mxu0 0.0
        %581 = vmatmul.mubr.f32.gmra.mrb[0].mxu0 %v514
        %v582 = vpop.f32.mrb[0].mxu0
        %v583 = vadd.f32 0.0, %v582
        %v584 = vpop.f32.mrb[0].mxu0
        %585 = vdwg.mxu0
        %v587 = vsel %vm366, %v345, 0
        %589 = vmatprep.subr.mxu0 0.0
        %590 = vmatpush1.msra.mxu0 %v358
        %591 = vmatprep.subr.mxu0 0.0
        %592 = vmatpush1.msra.mxu0 %v359
        %593 = vmatprep.subr.mxu0 0.0
        %594 = vmatpush1.msra.mxu0 %v360
        %595 = vmatprep.subr.mxu0 0.0
        %596 = vmatpush1.msra.mxu0 %v361
        %597 = vmatprep.subr.mxu0 0.0
        %598 = vmatpush1.msra.mxu0 0.0
        %599 = vmatprep.subr.mxu0 0.0
        %600 = vmatpush1.msra.mxu0 0.0
        %601 = vmatprep.subr.mxu0 0.0
        %602 = vmatpush1.msra.mxu0 0.0
        %603 = vmatprep.subr.mxu0 0.0
        %604 = vmatpush1.msra.mxu0 0.0
        %605 = vmatprep.subr.mxu0 0.0
        %606 = vmatpush1.msra.mxu0 0.0
        %607 = vmatprep.subr.mxu0 0.0
        %608 = vmatpush1.msra.mxu0 0.0
        %609 = vmatprep.subr.mxu0 0.0
        %610 = vmatpush1.msra.mxu0 0.0
        %611 = vmatprep.subr.mxu0 0.0
        %612 = vmatpush1.msra.mxu0 0.0
        %613 = vmatprep.subr.mxu0 0.0
        %614 = vmatpush1.msra.mxu0 0.0
        %615 = vmatprep.subr.mxu0 0.0
        %616 = vmatpush1.msra.mxu0 0.0
        %617 = vmatprep.subr.mxu0 0.0
        %618 = vmatpush1.msra.mxu0 0.0
        %619 = vmatprep.subr.mxu0 0.0
        %620 = vmatpush1.msra.mxu0 0.0
        %621 = vmatprep.subr.mxu0 0.0
        %622 = vmatpush1.msra.mxu0 0.0
        %623 = vmatprep.subr.mxu0 0.0
        %624 = vmatpush1.msra.mxu0 0.0
        %625 = vmatprep.subr.mxu0 0.0
        %626 = vmatpush1.msra.mxu0 0.0
        %627 = vmatprep.subr.mxu0 0.0
        %628 = vmatpush1.msra.mxu0 0.0
        %629 = vmatprep.subr.mxu0 0.0
        %630 = vmatpush1.msra.mxu0 0.0
        %631 = vmatprep.subr.mxu0 0.0
        %632 = vmatpush1.msra.mxu0 0.0
        %633 = vmatprep.subr.mxu0 0.0
        %634 = vmatpush1.msra.mxu0 0.0
        %635 = vmatprep.subr.mxu0 0.0
        %636 = vmatpush1.msra.mxu0 0.0
        %637 = vmatprep.subr.mxu0 0.0
        %638 = vmatpush1.msra.mxu0 0.0
        %639 = vmatprep.subr.mxu0 0.0
        %640 = vmatpush1.msra.mxu0 0.0
        %641 = vmatprep.subr.mxu0 0.0
        %642 = vmatpush1.msra.mxu0 0.0
        %643 = vmatprep.subr.mxu0 0.0
        %644 = vmatpush1.msra.mxu0 0.0
        %645 = vmatprep.subr.mxu0 0.0
        %646 = vmatpush1.msra.mxu0 0.0
        %647 = vmatprep.subr.mxu0 0.0
        %648 = vmatpush1.msra.mxu0 0.0
        %649 = vmatprep.subr.mxu0 0.0
        %650 = vmatpush1.msra.mxu0 0.0
        %651 = vmatprep.subr.mxu0 0.0
        %652 = vmatpush1.msra.mxu0 0.0
        %653 = vmatprep.mubr.f32.mxu0 0.0
        %654 = vmatmul.mubr.f32.gmra.mrb[0].mxu0 %v587
        %v655 = vpop.f32.mrb[0].mxu0
        %v656 = vadd.f32 0.0, %v655
        %v657 = vpop.f32.mrb[0].mxu0
        %658 = vdwg.mxu0
        %vm659 = vcmask 64512
        %v660 = vsel %vm659, %v437, -inf
        %661 = vmax.xlane.f32.xlu0 %v660
        %v662 = vpop.xlane.xlu0 %661
        %v663 = vsel %vm659, %v510, -inf
        %664 = vmax.xlane.f32.xlu0 %v663
        %v665 = vpop.xlane.xlu0 %664
        %v666 = vsel %vm659, %v583, -inf
        %667 = vmax.xlane.f32.xlu0 %v666
        %v668 = vpop.xlane.xlu0 %667
        %v669 = vsel %vm659, %v656, -inf
        %670 = vmax.xlane.f32.xlu0 %v669
        %v671 = vpop.xlane.xlu0 %670
        %v672 = vsub.f32 %v437, %v662
        %v673 = vsub.f32 %v510, %v665
        %v674 = vsub.f32 %v583, %v668
        %v675 = vsub.f32 %v656, %v671
        %v676 = vmul.f32 %v672, 1.442695
        %v677 = vpow.pop %v676
        %v678 = vmul.f32 %v673, 1.442695
        %v679 = vpow.pop %v678
        %v680 = vmul.f32 %v674, 1.442695
        %v681 = vpow.pop %v680
        %v682 = vmul.f32 %v675, 1.442695
        %v683 = vpow.pop %v682
        %v684 = vsel %vm659, %v677, 0.0
        %685 = vadd.xlane.f32.xlu0 %v684
        %v686 = vpop.xlane.xlu0 %685
        %v687 = vsel %vm659, %v679, 0.0
        %688 = vadd.xlane.f32.xlu0 %v687
        %v689 = vpop.xlane.xlu0 %688
        %v690 = vsel %vm659, %v681, 0.0
        %691 = vadd.xlane.f32.xlu0 %v690
        %v692 = vpop.xlane.xlu0 %691
        %v693 = vsel %vm659, %v683, 0.0
        %694 = vadd.xlane.f32.xlu0 %v693
        %v695 = vpop.xlane.xlu0 %694
        %v696 = vrcp.pop %v686
        %v697 = vrcp.pop %v689
        %v698 = vrcp.pop %v692
        %v699 = vrcp.pop %v695
        %v700 = vmul.f32 %v677, %v696
        %v701 = vmul.f32 %v679, %v697
        %v702 = vmul.f32 %v681, %v698
        %v703 = vmul.f32 %v683, %v699
        %v705 = vsel %vm659, %v700, 0
        %707 = vmatprep.subr.mxu0 0.0
        %708 = vmatpush1.msra.mxu0 %v362
        %709 = vmatprep.subr.mxu0 0.0
        %710 = vmatpush1.msra.mxu0 0.0
        %711 = vmatprep.subr.mxu0 0.0
        %712 = vmatpush1.msra.mxu0 0.0
        %713 = vmatprep.subr.mxu0 0.0
        %714 = vmatpush1.msra.mxu0 0.0
        %715 = vmatprep.subr.mxu0 0.0
        %716 = vmatpush1.msra.mxu0 0.0
        %717 = vmatprep.subr.mxu0 0.0
        %718 = vmatpush1.msra.mxu0 0.0
        %719 = vmatprep.subr.mxu0 0.0
        %720 = vmatpush1.msra.mxu0 0.0
        %721 = vmatprep.subr.mxu0 0.0
        %722 = vmatpush1.msra.mxu0 0.0
        %723 = vmatprep.subr.mxu0 0.0
        %724 = vmatpush1.msra.mxu0 0.0
        %725 = vmatprep.subr.mxu0 0.0
        %726 = vmatpush1.msra.mxu0 0.0
        %727 = vmatprep.subr.mxu0 0.0
        %728 = vmatpush1.msra.mxu0 0.0
        %729 = vmatprep.subr.mxu0 0.0
        %730 = vmatpush1.msra.mxu0 0.0
        %731 = vmatprep.subr.mxu0 0.0
        %732 = vmatpush1.msra.mxu0 0.0
        %733 = vmatprep.subr.mxu0 0.0
        %734 = vmatpush1.msra.mxu0 0.0
        %735 = vmatprep.subr.mxu0 0.0
        %736 = vmatpush1.msra.mxu0 0.0
        %737 = vmatprep.subr.mxu0 0.0
        %738 = vmatpush1.msra.mxu0 0.0
        %739 = vmatprep.subr.mxu0 0.0
        %740 = vmatpush1.msra.mxu0 0.0
        %741 = vmatprep.subr.mxu0 0.0
        %742 = vmatpush1.msra.mxu0 0.0
        %743 = vmatprep.subr.mxu0 0.0
        %744 = vmatpush1.msra.mxu0 0.0
        %745 = vmatprep.subr.mxu0 0.0
        %746 = vmatpush1.msra.mxu0 0.0
        %747 = vmatprep.subr.mxu0 0.0
        %748 = vmatpush1.msra.mxu0 0.0
        %749 = vmatprep.subr.mxu0 0.0
        %750 = vmatpush1.msra.mxu0 0.0
        %751 = vmatprep.subr.mxu0 0.0
        %752 = vmatpush1.msra.mxu0 0.0
        %753 = vmatprep.subr.mxu0 0.0
        %754 = vmatpush1.msra.mxu0 0.0
        %755 = vmatprep.subr.mxu0 0.0
        %756 = vmatpush1.msra.mxu0 0.0
        %757 = vmatprep.subr.mxu0 0.0
        %758 = vmatpush1.msra.mxu0 0.0
        %759 = vmatprep.subr.mxu0 0.0
        %760 = vmatpush1.msra.mxu0 0.0
        %761 = vmatprep.subr.mxu0 0.0
        %762 = vmatpush1.msra.mxu0 0.0
        %763 = vmatprep.subr.mxu0 0.0
        %764 = vmatpush1.msra.mxu0 0.0
        %765 = vmatprep.subr.mxu0 0.0
        %766 = vmatpush1.msra.mxu0 0.0
        %767 = vmatprep.subr.mxu0 0.0
        %768 = vmatpush1.msra.mxu0 0.0
        %769 = vmatprep.subr.mxu0 0.0
        %770 = vmatpush1.msra.mxu0 0.0
        %771 = vmatprep.mubr.f32.mxu0 0.0
        %772 = vmatmul.mubr.f32.gmra.mrb[0].mxu0 %v705
        %v773 = vpop.f32.mrb[0].mxu0
        %v774 = vadd.f32 0.0, %v773
        %v775 = vpop.f32.mrb[0].mxu0
        %776 = vdwg.mxu0
        %v778 = vsel %vm659, %v701, 0
        %780 = vmatprep.subr.mxu0 0.0
        %781 = vmatpush1.msra.mxu0 %v363
        %782 = vmatprep.subr.mxu0 0.0
        %783 = vmatpush1.msra.mxu0 0.0
        %784 = vmatprep.subr.mxu0 0.0
        %785 = vmatpush1.msra.mxu0 0.0
        %786 = vmatprep.subr.mxu0 0.0
        %787 = vmatpush1.msra.mxu0 0.0
        %788 = vmatprep.subr.mxu0 0.0
        %789 = vmatpush1.msra.mxu0 0.0
        %790 = vmatprep.subr.mxu0 0.0
        %791 = vmatpush1.msra.mxu0 0.0
        %792 = vmatprep.subr.mxu0 0.0
        %793 = vmatpush1.msra.mxu0 0.0
        %794 = vmatprep.subr.mxu0 0.0
        %795 = vmatpush1.msra.mxu0 0.0
        %796 = vmatprep.subr.mxu0 0.0
        %797 = vmatpush1.msra.mxu0 0.0
        %798 = vmatprep.subr.mxu0 0.0
        %799 = vmatpush1.msra.mxu0 0.0
        %800 = vmatprep.subr.mxu0 0.0
        %801 = vmatpush1.msra.mxu0 0.0
        %802 = vmatprep.subr.mxu0 0.0
        %803 = vmatpush1.msra.mxu0 0.0
        %804 = vmatprep.subr.mxu0 0.0
        %805 = vmatpush1.msra.mxu0 0.0
        %806 = vmatprep.subr.mxu0 0.0
        %807 = vmatpush1.msra.mxu0 0.0
        %808 = vmatprep.subr.mxu0 0.0
        %809 = vmatpush1.msra.mxu0 0.0
        %810 = vmatprep.subr.mxu0 0.0
        %811 = vmatpush1.msra.mxu0 0.0
        %812 = vmatprep.subr.mxu0 0.0
        %813 = vmatpush1.msra.mxu0 0.0
        %814 = vmatprep.subr.mxu0 0.0
        %815 = vmatpush1.msra.mxu0 0.0
        %816 = vmatprep.subr.mxu0 0.0
        %817 = vmatpush1.msra.mxu0 0.0
        %818 = vmatprep.subr.mxu0 0.0
        %819 = vmatpush1.msra.mxu0 0.0
        %820 = vmatprep.subr.mxu0 0.0
        %821 = vmatpush1.msra.mxu0 0.0
        %822 = vmatprep.subr.mxu0 0.0
        %823 = vmatpush1.msra.mxu0 0.0
        %824 = vmatprep.subr.mxu0 0.0
        %825 = vmatpush1.msra.mxu0 0.0
        %826 = vmatprep.subr.mxu0 0.0
        %827 = vmatpush1.msra.mxu0 0.0
        %828 = vmatprep.subr.mxu0 0.0
        %829 = vmatpush1.msra.mxu0 0.0
        %830 = vmatprep.subr.mxu0 0.0
        %831 = vmatpush1.msra.mxu0 0.0
        %832 = vmatprep.subr.mxu0 0.0
        %833 = vmatpush1.msra.mxu0 0.0
        %834 = vmatprep.subr.mxu0 0.0
        %835 = vmatpush1.msra.mxu0 0.0
        %836 = vmatprep.subr.mxu0 0.0
        %837 = vmatpush1.msra.mxu0 0.0
        %838 = vmatprep.subr.mxu0 0.0
        %839 = vmatpush1.msra.mxu0 0.0
        %840 = vmatprep.subr.mxu0 0.0
        %841 = vmatpush1.msra.mxu0 0.0
        %842 = vmatprep.subr.mxu0 0.0
        %843 = vmatpush1.msra.mxu0 0.0
        %844 = vmatprep.mubr.f32.mxu0 0.0
        %845 = vmatmul.mubr.f32.gmra.mrb[0].mxu0 %v778
        %v846 = vpop.f32.mrb[0].mxu0
        %v847 = vadd.f32 0.0, %v846
        %v848 = vpop.f32.mrb[0].mxu0
        %849 = vdwg.mxu0
        %v851 = vsel %vm659, %v702, 0
        %853 = vmatprep.subr.mxu0 0.0
        %854 = vmatpush1.msra.mxu0 %v364
        %855 = vmatprep.subr.mxu0 0.0
        %856 = vmatpush1.msra.mxu0 0.0
        %857 = vmatprep.subr.mxu0 0.0
        %858 = vmatpush1.msra.mxu0 0.0
        %859 = vmatprep.subr.mxu0 0.0
        %860 = vmatpush1.msra.mxu0 0.0
        %861 = vmatprep.subr.mxu0 0.0
        %862 = vmatpush1.msra.mxu0 0.0
        %863 = vmatprep.subr.mxu0 0.0
        %864 = vmatpush1.msra.mxu0 0.0
        %865 = vmatprep.subr.mxu0 0.0
        %866 = vmatpush1.msra.mxu0 0.0
        %867 = vmatprep.subr.mxu0 0.0
        %868 = vmatpush1.msra.mxu0 0.0
        %869 = vmatprep.subr.mxu0 0.0
        %870 = vmatpush1.msra.mxu0 0.0
        %871 = vmatprep.subr.mxu0 0.0
        %872 = vmatpush1.msra.mxu0 0.0
        %873 = vmatprep.subr.mxu0 0.0
        %874 = vmatpush1.msra.mxu0 0.0
        %875 = vmatprep.subr.mxu0 0.0
        %876 = vmatpush1.msra.mxu0 0.0
        %877 = vmatprep.subr.mxu0 0.0
        %878 = vmatpush1.msra.mxu0 0.0
        %879 = vmatprep.subr.mxu0 0.0
        %880 = vmatpush1.msra.mxu0 0.0
        %881 = vmatprep.subr.mxu0 0.0
        %882 = vmatpush1.msra.mxu0 0.0
        %883 = vmatprep.subr.mxu0 0.0
        %884 = vmatpush1.msra.mxu0 0.0
        %885 = vmatprep.subr.mxu0 0.0
        %886 = vmatpush1.msra.mxu0 0.0
        %887 = vmatprep.subr.mxu0 0.0
        %888 = vmatpush1.msra.mxu0 0.0
        %889 = vmatprep.subr.mxu0 0.0
        %890 = vmatpush1.msra.mxu0 0.0
        %891 = vmatprep.subr.mxu0 0.0
        %892 = vmatpush1.msra.mxu0 0.0
        %893 = vmatprep.subr.mxu0 0.0
        %894 = vmatpush1.msra.mxu0 0.0
        %895 = vmatprep.subr.mxu0 0.0
        %896 = vmatpush1.msra.mxu0 0.0
        %897 = vmatprep.subr.mxu0 0.0
        %898 = vmatpush1.msra.mxu0 0.0
        %899 = vmatprep.subr.mxu0 0.0
        %900 = vmatpush1.msra.mxu0 0.0
        %901 = vmatprep.subr.mxu0 0.0
        %902 = vmatpush1.msra.mxu0 0.0
        %903 = vmatprep.subr.mxu0 0.0
        %904 = vmatpush1.msra.mxu0 0.0
        %905 = vmatprep.subr.mxu0 0.0
        %906 = vmatpush1.msra.mxu0 0.0
        %907 = vmatprep.subr.mxu0 0.0
        %908 = vmatpush1.msra.mxu0 0.0
        %909 = vmatprep.subr.mxu0 0.0
        %910 = vmatpush1.msra.mxu0 0.0
        %911 = vmatprep.subr.mxu0 0.0
        %912 = vmatpush1.msra.mxu0 0.0
        %913 = vmatprep.subr.mxu0 0.0
        %914 = vmatpush1.msra.mxu0 0.0
        %915 = vmatprep.subr.mxu0 0.0
        %916 = vmatpush1.msra.mxu0 0.0
        %917 = vmatprep.mubr.f32.mxu0 0.0
        %918 = vmatmul.mubr.f32.gmra.mrb[0].mxu0 %v851
        %v919 = vpop.f32.mrb[0].mxu0
        %v920 = vadd.f32 0.0, %v919
        %v921 = vpop.f32.mrb[0].mxu0
        %922 = vdwg.mxu0
        %v924 = vsel %vm659, %v703, 0
        %926 = vmatprep.subr.mxu0 0.0
        %927 = vmatpush1.msra.mxu0 %v365
        %928 = vmatprep.subr.mxu0 0.0
        %929 = vmatpush1.msra.mxu0 0.0
        %930 = vmatprep.subr.mxu0 0.0
        %931 = vmatpush1.msra.mxu0 0.0
        %932 = vmatprep.subr.mxu0 0.0
        %933 = vmatpush1.msra.mxu0 0.0
        %934 = vmatprep.subr.mxu0 0.0
        %935 = vmatpush1.msra.mxu0 0.0
        %936 = vmatprep.subr.mxu0 0.0
        %937 = vmatpush1.msra.mxu0 0.0
        %938 = vmatprep.subr.mxu0 0.0
        %939 = vmatpush1.msra.mxu0 0.0
        %940 = vmatprep.subr.mxu0 0.0
        %941 = vmatpush1.msra.mxu0 0.0
        %942 = vmatprep.subr.mxu0 0.0
        %943 = vmatpush1.msra.mxu0 0.0
        %944 = vmatprep.subr.mxu0 0.0
        %945 = vmatpush1.msra.mxu0 0.0
        %946 = vmatprep.subr.mxu0 0.0
        %947 = vmatpush1.msra.mxu0 0.0
        %948 = vmatprep.subr.mxu0 0.0
        %949 = vmatpush1.msra.mxu0 0.0
        %950 = vmatprep.subr.mxu0 0.0
        %951 = vmatpush1.msra.mxu0 0.0
        %952 = vmatprep.subr.mxu0 0.0
        %953 = vmatpush1.msra.mxu0 0.0
        %954 = vmatprep.subr.mxu0 0.0
        %955 = vmatpush1.msra.mxu0 0.0
        %956 = vmatprep.subr.mxu0 0.0
        %957 = vmatpush1.msra.mxu0 0.0
        %958 = vmatprep.subr.mxu0 0.0
        %959 = vmatpush1.msra.mxu0 0.0
        %960 = vmatprep.subr.mxu0 0.0
        %961 = vmatpush1.msra.mxu0 0.0
        %962 = vmatprep.subr.mxu0 0.0
        %963 = vmatpush1.msra.mxu0 0.0
        %964 = vmatprep.subr.mxu0 0.0
        %965 = vmatpush1.msra.mxu0 0.0
        %966 = vmatprep.subr.mxu0 0.0
        %967 = vmatpush1.msra.mxu0 0.0
        %968 = vmatprep.subr.mxu0 0.0
        %969 = vmatpush1.msra.mxu0 0.0
        %970 = vmatprep.subr.mxu0 0.0
        %971 = vmatpush1.msra.mxu0 0.0
        %972 = vmatprep.subr.mxu0 0.0
        %973 = vmatpush1.msra.mxu0 0.0
        %974 = vmatprep.subr.mxu0 0.0
        %975 = vmatpush1.msra.mxu0 0.0
        %976 = vmatprep.subr.mxu0 0.0
        %977 = vmatpush1.msra.mxu0 0.0
        %978 = vmatprep.subr.mxu0 0.0
        %979 = vmatpush1.msra.mxu0 0.0
        %980 = vmatprep.subr.mxu0 0.0
        %981 = vmatpush1.msra.mxu0 0.0
        %982 = vmatprep.subr.mxu0 0.0
        %983 = vmatpush1.msra.mxu0 0.0
        %984 = vmatprep.subr.mxu0 0.0
        %985 = vmatpush1.msra.mxu0 0.0
        %986 = vmatprep.subr.mxu0 0.0
        %987 = vmatpush1.msra.mxu0 0.0
        %988 = vmatprep.subr.mxu0 0.0
        %989 = vmatpush1.msra.mxu0 0.0
        %990 = vmatprep.mubr.f32.mxu0 0.0
        %991 = vmatmul.mubr.f32.gmra.mrb[0].mxu0 %v924
        %v992 = vpop.f32.mrb[0].mxu0
        %v993 = vadd.f32 0.0, %v992
        %v994 = vpop.f32.mrb[0].mxu0
        %995 = vdwg.mxu0
        %996 = vst.msk [vmem:[%s294] sm:$0xff] %vm366, %v774
        %997 = vst.msk [vmem:[%s294 + $0x8] sm:$0xff] %vm366, %v847
        %998 = vst.msk [vmem:[%s294 + $0x10] sm:$0xff] %vm366, %v920
        %999 = vst.msk [vmem:[%s294 + $0x18] sm:$0xff] %vm366, %v993
        %1000 = vst.msk [vmem:[%s301] sm:$0xff] %vm659, %v700
        %1001 = vst.msk [vmem:[%s301 + $0x8] sm:$0xff] %vm659, %v701
        %1002 = vst.msk [vmem:[%s301 + $0x10] sm:$0xff] %vm659, %v702
        %1003 = vst.msk [vmem:[%s301 + $0x18] sm:$0xff] %vm659, %v703
        %s1004 = sand.u32 %s139, 1
        %s1005 = scalar_lea.sflag [#allocation3], %s1004
        %s1006 = sand.u32 %s139, 1
        %s1007 = smul.addr %s1006, 32
        %s1008 = scalar_lea.vmem [#allocation2], %s1007
        %s1009 = sand.u32 %s169, 1
        %s1010 = scalar_lea.sflag [#allocation5], %s1009
        %s1011 = sand.u32 %s169, 1
        %s1012 = smul.addr %s1011, 32
        %s1013 = scalar_lea.vmem [#allocation4], %s1012
        // Predicated region
        $region33: #{tpu_custom_call.1} parent=31 // pred_check
          %p1014 = pneg %p149
        $region34: #{tpu_custom_call.1} parent=31 // pred_check_branch
          %1016 = sbr.rel (%p1014) target = $region36
        $region35: #{tpu_custom_call.1} parent=31 // pred_region
          %s1017 = smul.u32 4, %s28
          %s1019 = ssub.s32 512, 512
          %1020 = vsyncadd %s1005, %s1019
          %s1021 = sadd.s32 %s29, %s1017
          %s1022 = smul.addr %s27, 4
          %s1023 = sadd.s32 %s1021, %s1022
          %s1024 = smul.addr %s1023, 128
          %s1025 = scalar_lea.hbm %s3, %s1024
          %s1026 = sshll.u32 %s1008, 4
          %s1027 = int_to_ptr.vmem [resolvable:$true] %s1026
          %1032 = dma.vmem_to_hbm [thread:$0]  %s1027, 512, %s1025, %s1005, 128, 128, 8
        $region36: #{tpu_custom_call.1} parent=31 // pred_fallthru
          _
        // Predicated region
        $region37: #{tpu_custom_call.1} parent=31 // pred_check
          %p1033 = pneg %p179
        $region38: #{tpu_custom_call.1} parent=31 // pred_check_branch
          %1035 = sbr.rel (%p1033) target = $region40
        $region39: #{tpu_custom_call.1} parent=31 // pred_region
          %s1036 = smul.u32 4, %s28
          %s1038 = ssub.s32 512, 512
          %1039 = vsyncadd %s1010, %s1038
          %s1040 = sadd.s32 %s29, %s1036
          %s1041 = smul.addr %s27, 4
          %s1042 = sadd.s32 %s1040, %s1041
          %s1043 = smul.addr %s1042, 128
          %s1044 = scalar_lea.hbm %s4, %s1043
          %s1045 = sshll.u32 %s1013, 4
          %s1046 = int_to_ptr.vmem [resolvable:$true] %s1045
          %1051 = dma.vmem_to_hbm [thread:$0]  %s1046, 512, %s1044, %s1010, 128, 128, 8
        $region40: #{tpu_custom_call.1} parent=31 // pred_fallthru
          _
      $region32: #{tpu_custom_call.1} parent=5 // pred_fallthru
        _
      %p1052 = scmp.le.s32.totalorder 2, %s17
      // Predicated region
      $region41: #{tpu_custom_call.1} parent=5 // pred_check
        %p1053 = pneg %p1052
      $region42: #{tpu_custom_call.1} parent=5 // pred_check_branch
        %1055 = sbr.rel (%p1053) target = $region44
      $region43: #{tpu_custom_call.1} parent=5 // pred_region
        %s1056 = ssub.s32 %s17, 2
        // Predicated region
        $region45: #{tpu_custom_call.1} parent=43 // pred_check
          %p1057 = pneg %p155
        $region46: #{tpu_custom_call.1} parent=43 // pred_check_branch
          %1059 = sbr.rel (%p1057) target = $region48
        $region47: #{tpu_custom_call.1} parent=43 // pred_region
          %s1060 = sand.u32 %s140, 1
          %s1061 = scalar_lea.sflag [#allocation3], %s1060
          %s1062 = sand.u32 %s140, 1
          %s1063 = smul.addr %s1062, 32
          %s1064 = scalar_lea.vmem [#allocation2], %s1063
          %1065 = dma.done %s1061, 512
        $region48: #{tpu_custom_call.1} parent=43 // pred_fallthru
          _
        // Predicated region
        $region49: #{tpu_custom_call.1} parent=43 // pred_check
          %p1066 = pneg %p185
        $region50: #{tpu_custom_call.1} parent=43 // pred_check_branch
          %1068 = sbr.rel (%p1066) target = $region52
        $region51: #{tpu_custom_call.1} parent=43 // pred_region
          %s1069 = sand.u32 %s170, 1
          %s1070 = scalar_lea.sflag [#allocation5], %s1069
          %s1071 = sand.u32 %s170, 1
          %s1072 = smul.addr %s1071, 32
          %s1073 = scalar_lea.vmem [#allocation4], %s1072
          %1074 = dma.done %s1070, 512
        $region52: #{tpu_custom_call.1} parent=43 // pred_fallthru
          _
      $region44: #{tpu_custom_call.1} parent=5 // pred_fallthru
        _
    $region6: #{tpu_custom_call.1} parent=1 // loop_footer
      %s21 = sadd.s32 1, %s17
    $region7: #{tpu_custom_call.1} parent=1 // loop_footer_branch
      %16 = sbr.rel target = $region3
    $region8: #{tpu_custom_call.1} parent=1 // loop_exit
      _
    %1075 = vsyncpa [#allocation3], 1
    %s1076 = scalar_lea.sflag [#allocation3], 1
    %1077 = vsyncpa %s1076, 1
    %1078 = vsyncpa [#allocation5], 1
    %s1079 = scalar_lea.sflag [#allocation5], 1
    %1080 = vsyncpa %s1079, 1

</llo_original>
